<compile_context>
chip_gen: v6e
topology: v6e:2x2x1
jax: 0.10.0
libtpu: 0.0.40
codegen_flags: <defaults>
</compile_context>

<pallas_src>
import jax
import jax.numpy as jnp
from jax.experimental import pallas as pl
from jax.experimental.pallas import tpu as pltpu

BN_EPS = 1e-5


def _full_spec(shape):
    """BlockSpec covering the whole (small) array as a single block."""
    return pl.BlockSpec(shape, lambda i: (0,) * len(shape))


# ----------------------------------------------------------------------------
# Pallas kernels
# ----------------------------------------------------------------------------

def conv_block_kernel(a_ref, w_ref, b_ref, or_ref, oi_ref):
    """Packed complex conv GEMM + bias + BatchNorm(batch stats) + ReLU.

    a_ref : [2K, M]   packed im2col patches  [Ar^T ; Ai^T]
    w_ref : [2OC, 2K] packed weights         [[Wr, -Wi], [Wi, Wr]]
    b_ref : [2OC, 1]  packed bias            [br ; bi]
    out   : or/oi [OC, M]  channel-major, M = N*OH*OW on the lane axis.
    """
    y = jnp.dot(w_ref[...], a_ref[...], preferred_element_type=jnp.float32)
    y = y + b_ref[...]
    # per-(part, channel) batch statistics over the N*OH*OW axis
    mean = jnp.mean(y, axis=-1, keepdims=True)
    var = jnp.mean(jnp.square(y - mean), axis=-1, keepdims=True)
    z = jnp.maximum((y - mean) * jax.lax.rsqrt(var + BN_EPS), 0.0)
    oc = or_ref.shape[0]
    or_ref[...] = z[:oc, :]
    oi_ref[...] = z[oc:, :]


def conv_block_gemm_bn_relu(a_pack, w_pack, b_pack, oc):
    k2, m = a_pack.shape
    n2 = w_pack.shape[0]
    return pl.pallas_call(
        conv_block_kernel,
        grid=(1,),
        in_specs=[_full_spec((k2, m)), _full_spec((n2, k2)), _full_spec((n2, 1))],
        out_specs=(_full_spec((oc, m)), _full_spec((oc, m))),
        out_shape=(jax.ShapeDtypeStruct((oc, m), jnp.float32),
                   jax.ShapeDtypeStruct((oc, m), jnp.float32)),
        compiler_params=pltpu.CompilerParams(dimension_semantics=("arbitrary",)),
    )(a_pack, w_pack, b_pack)


def mlp_head_kernel(x_ref, w1_ref, b1_ref, w2_ref, b2_ref, wc_ref, bc_ref, o_ref):
    """fc1+BN+ReLU -> fc2+BN+ReLU -> classifier -> |h|^2 -> log_softmax.

    Packed-complex layout throughout:
      x : [B, 2F] = [Xr, Xi] ; w : [2F, 2H] = [[Br, Bi], [-Bi, Br]] ; b : [1, 2H]
    The packed [real, imag] activation feeds the next packed GEMM directly, and
    per-column BN over the batch axis is exactly per-(part, channel) naive BN.
    """
    def bn_relu(h):
        mean = jnp.mean(h, axis=0, keepdims=True)
        var = jnp.mean(jnp.square(h - mean), axis=0, keepdims=True)
        return jnp.maximum((h - mean) * jax.lax.rsqrt(var + BN_EPS), 0.0)

    h = jnp.dot(x_ref[...], w1_ref[...], preferred_element_type=jnp.float32)
    h = bn_relu(h + b1_ref[...])
    h = jnp.dot(h, w2_ref[...], preferred_element_type=jnp.float32)
    h = bn_relu(h + b2_ref[...])
    h = jnp.dot(h, wc_ref[...], preferred_element_type=jnp.float32) + bc_ref[...]
    c = o_ref.shape[-1]
    hr = h[:, :c]
    hi = h[:, c:]
    p = hr * hr + hi * hi
    m = jnp.max(p, axis=-1, keepdims=True)
    e = jnp.exp(p - m)
    o_ref[...] = p - m - jnp.log(jnp.sum(e, axis=-1, keepdims=True))


def mlp_head(x_pack, w1, b1, w2, b2, wc, bc):
    b = x_pack.shape[0]
    c = wc.shape[1] // 2
    return pl.pallas_call(
        mlp_head_kernel,
        grid=(1,),
        in_specs=[_full_spec(x_pack.shape),
                  _full_spec(w1.shape), _full_spec(b1.shape),
                  _full_spec(w2.shape), _full_spec(b2.shape),
                  _full_spec(wc.shape), _full_spec(bc.shape)],
        out_specs=_full_spec((b, c)),
        out_shape=jax.ShapeDtypeStruct((b, c), jnp.float32),
        compiler_params=pltpu.CompilerParams(dimension_semantics=("arbitrary",)),
    )(x_pack, w1, b1, w2, b2, wc, bc)


# ----------------------------------------------------------------------------
# Plain-JAX glue (layout plumbing only)
# ----------------------------------------------------------------------------

def im2col_cf(x, kh, kw):
    """x: [C, N, H, W] (channel-first) -> transposed patches [C*KH*KW, N*OH*OW]."""
    c, n, h, w = x.shape
    oh, ow = h - kh + 1, w - kw + 1
    cols = []
    for di in range(kh):
        for dj in range(kw):
            cols.append(x[:, :, di:di + oh, dj:dj + ow])
    p = jnp.stack(cols, axis=1)                       # [C, KH*KW, N, OH, OW]
    return p.reshape(c * kh * kw, n * oh * ow), oh, ow


def pack_conv_weight(wr, wi):
    oc = wr.shape[0]
    wr2 = wr.reshape(oc, -1)
    wi2 = wi.reshape(oc, -1)
    top = jnp.concatenate([wr2, -wi2], axis=1)
    bot = jnp.concatenate([wi2, wr2], axis=1)
    return jnp.concatenate([top, bot], axis=0)        # [2OC, 2K]


def pack_linear_weight(wr, wi):
    br, bi = wr.T, wi.T                               # [in, out] (PyTorch w is [out, in])
    top = jnp.concatenate([br, bi], axis=1)
    bot = jnp.concatenate([-bi, br], axis=1)
    return jnp.concatenate([top, bot], axis=0)        # [2in, 2out]


def pack_linear_bias(br, bi):
    return jnp.concatenate([br, bi]).reshape(1, -1)   # [1, 2out]


def complex_maxpool2d_cf(xr, xi):
    """2x2 / stride 2 max pooling by complex magnitude; [C, N, H, W] in/out."""
    c, n, h, w = xr.shape
    h2, w2 = h // 2, w // 2
    xr = xr[:, :, :h2 * 2, :w2 * 2].reshape(c, n, h2, 2, w2, 2)
    xi = xi[:, :, :h2 * 2, :w2 * 2].reshape(c, n, h2, 2, w2, 2)

    def pick(ar, ai, br_, bi_):
        keep = (ar * ar + ai * ai) >= (br_ * br_ + bi_ * bi_)
        return jnp.where(keep, ar, br_), jnp.where(keep, ai, bi_)

    r0, i0 = pick(xr[:, :, :, 0, :, 0], xi[:, :, :, 0, :, 0],
                  xr[:, :, :, 0, :, 1], xi[:, :, :, 0, :, 1])
    r1, i1 = pick(xr[:, :, :, 1, :, 0], xi[:, :, :, 1, :, 0],
                  xr[:, :, :, 1, :, 1], xi[:, :, :, 1, :, 1])
    return pick(r0, i0, r1, i1)                       # [C, N, H2, W2] each


def conv_bn_relu_pool_block(xr_cf, xi_cf, params):
    wr, wi, br, bi = params
    oc, _, kh, kw = wr.shape
    ar, oh, ow = im2col_cf(xr_cf, kh, kw)
    ai, _, _ = im2col_cf(xi_cf, kh, kw)
    a_pack = jnp.concatenate([ar, ai], axis=0)        # [2K, M]
    w_pack = pack_conv_weight(wr, wi)
    b_pack = jnp.concatenate([br, bi]).reshape(2 * oc, 1)
    n = xr_cf.shape[1]
    yr, yi = conv_block_gemm_bn_relu(a_pack, w_pack, b_pack, oc)
    yr = yr.reshape(oc, n, oh, ow)
    yi = yi.reshape(oc, n, oh, ow)
    return complex_maxpool2d_cf(yr, yi)


def forward(params, xr, xi):
    # NCHW input -> channel-first [C, N, H, W] once up front (no per-block churn).
    xr = xr.transpose(1, 0, 2, 3)
    xi = xi.transpose(1, 0, 2, 3)
    xr, xi = conv_bn_relu_pool_block(xr, xi, params["conv1"])
    xr, xi = conv_bn_relu_pool_block(xr, xi, params["conv2"])

    # torch.flatten(x, 1) on NCHW: feature order (C, H, W).
    c, n, h, w = xr.shape
    fr = xr.transpose(1, 0, 2, 3).reshape(n, c * h * w)
    fi = xi.transpose(1, 0, 2, 3).reshape(n, c * h * w)
    x_pack = jnp.concatenate([fr, fi], axis=1)        # [B, 2F]

    w1 = pack_linear_weight(params["fc1"][0], params["fc1"][1])
    b1 = pack_linear_bias(params["fc1"][2], params["fc1"][3])
    w2 = pack_linear_weight(params["fc2"][0], params["fc2"][1])
    b2 = pack_linear_bias(params["fc2"][2], params["fc2"][3])
    wc = pack_linear_weight(params["classifier"][0], params["classifier"][1])
    bc = pack_linear_bias(params["classifier"][2], params["classifier"][3])
    return mlp_head(x_pack, w1, b1, w2, b2, wc, bc)


# ----------------------------------------------------------------------------
# Deterministic parameter init & driver
# ----------------------------------------------------------------------------

def init_complex_pair(key, shape, scale=0.1):
    kr, ki = jax.random.split(key)
    return (scale * jax.random.normal(kr, shape, jnp.float32),
            scale * jax.random.normal(ki, shape, jnp.float32))


def init_params(key):
    # cfg: conv1_out_channels=8 (k=3), conv2_out_channels=8 (k=3),
    #      num_hidden=32, num_classes=10; linear_in=32 for the 16x16 input used
    #      here (the reference hard-codes 26000 for its own input resolution).
    keys = jax.random.split(key, 10)
    p = {}
    c1w = init_complex_pair(keys[0], (8, 1, 3, 3))
    c1b = init_complex_pair(keys[1], (8,))
    p["conv1"] = (c1w[0], c1w[1], c1b[0], c1b[1])
    c2w = init_complex_pair(keys[2], (8, 8, 3, 3))
    c2b = init_complex_pair(keys[3], (8,))
    p["conv2"] = (c2w[0], c2w[1], c2b[0], c2b[1])
    f1w = init_complex_pair(keys[4], (32, 32))
    f1b = init_complex_pair(keys[5], (32,))
    p["fc1"] = (f1w[0], f1w[1], f1b[0], f1b[1])
    f2w = init_complex_pair(keys[6], (32, 32))
    f2b = init_complex_pair(keys[7], (32,))
    p["fc2"] = (f2w[0], f2w[1], f2b[0], f2b[1])
    clw = init_complex_pair(keys[8], (10, 32))
    clb = init_complex_pair(keys[9], (10,))
    p["classifier"] = (clw[0], clw[1], clb[0], clb[1])
    return p


if __name__ == "__main__":
    key = jax.random.PRNGKey(0)
    kp, kxr, kxi = jax.random.split(key, 3)
    params = init_params(kp)
    # complex input x = xr + i*xi, shape [2, 1, 16, 16] (NCHW, in_channels=1)
    xr = jax.random.normal(kxr, (2, 1, 16, 16), jnp.float32)
    xi = jax.random.normal(kxi, (2, 1, 16, 16), jnp.float32)

    out = jax.jit(forward)(params, xr, xi)
    out = jax.block_until_ready(out)

    assert out.shape == (2, 10)
    assert bool(jnp.all(jnp.isfinite(out)))
    # log_softmax rows sum to 1 in probability space
    assert bool(jnp.allclose(jnp.sum(jnp.exp(out), axis=1), 1.0, atol=1e-4))
    print("KERNEL_OK")
</pallas_src>

<mosaic_0001>
module attributes {stable_mosaic.version = 11 : i64} {
  func.func @conv_block_kernel(%arg0: i32, %arg1: memref<18x392xf32, #tpu.memory_space<vmem>>, %arg2: memref<16x18xf32, #tpu.memory_space<vmem>>, %arg3: memref<16x1xf32, #tpu.memory_space<vmem>>, %arg4: memref<8x392xf32, #tpu.memory_space<vmem>>, %arg5: memref<8x392xf32, #tpu.memory_space<vmem>>) attributes {dimension_semantics = [#tpu.dimension_semantics<arbitrary>], iteration_bounds = array<i64: 1>, scalar_prefetch = 0 : i64, scratch_operands = 0 : i64, tpu.core_type = #tpu.core_type<tc>, window_params = [{pipeline_mode = #tpu.pipeline_mode<synchronous>, transform_indices = @transform_0, window_bounds = array<i64: 18, 392>}, {pipeline_mode = #tpu.pipeline_mode<synchronous>, transform_indices = @transform_1, window_bounds = array<i64: 16, 18>}, {pipeline_mode = #tpu.pipeline_mode<synchronous>, transform_indices = @transform_2, window_bounds = array<i64: 16, 1>}, {pipeline_mode = #tpu.pipeline_mode<synchronous>, transform_indices = @transform_3, window_bounds = array<i64: 8, 392>}, {pipeline_mode = #tpu.pipeline_mode<synchronous>, transform_indices = @transform_4, window_bounds = array<i64: 8, 392>}]} {
    %c0 = arith.constant 0 : index
    %c0_0 = arith.constant 0 : index
    %0 = vector.load %arg2[%c0, %c0_0] : memref<16x18xf32, #tpu.memory_space<vmem>>, vector<16x18xf32>
    %c0_1 = arith.constant 0 : index
    %c0_2 = arith.constant 0 : index
    %1 = vector.load %arg1[%c0_1, %c0_2] : memref<18x392xf32, #tpu.memory_space<vmem>>, vector<18x392xf32>
    %cst = arith.constant dense<0.000000e+00> : vector<16x392xf32>
    %2 = tpu.matmul %0, %1, %cst {dimension_numbers = #tpu.dot_dimension_numbers<[1], [0], [0], [1], [0, 0, 1, 1], [], []>} : vector<16x18xf32>, vector<18x392xf32>, vector<16x392xf32> -> vector<16x392xf32>
    %c0_3 = arith.constant 0 : index
    %c0_4 = arith.constant 0 : index
    %3 = vector.load %arg3[%c0_3, %c0_4] : memref<16x1xf32, #tpu.memory_space<vmem>>, vector<16x1xf32>
    %4 = vector.broadcast %3 : vector<16x1xf32> to vector<16x392xf32>
    %5 = arith.addf %2, %4 : vector<16x392xf32>
    %cst_5 = arith.constant dense<0.000000e+00> : vector<16xf32>
    %6 = vector.multi_reduction <add>, %5, %cst_5 [1] : vector<16x392xf32> to vector<16xf32>
    %7 = vector.shape_cast %6 : vector<16xf32> to vector<16x1xf32>
    %cst_6 = arith.constant 3.920000e+02 : f32
    %8 = vector.broadcast %cst_6 : f32 to vector<16x1xf32>
    %9 = arith.divf %7, %8 : vector<16x1xf32>
    %10 = vector.broadcast %9 : vector<16x1xf32> to vector<16x392xf32>
    %11 = arith.subf %5, %10 : vector<16x392xf32>
    %12 = arith.mulf %11, %11 : vector<16x392xf32>
    %cst_7 = arith.constant dense<0.000000e+00> : vector<16xf32>
    %13 = vector.multi_reduction <add>, %12, %cst_7 [1] : vector<16x392xf32> to vector<16xf32>
    %14 = vector.shape_cast %13 : vector<16xf32> to vector<16x1xf32>
    %cst_8 = arith.constant 3.920000e+02 : f32
    %15 = vector.broadcast %cst_8 : f32 to vector<16x1xf32>
    %16 = arith.divf %14, %15 : vector<16x1xf32>
    %17 = vector.broadcast %9 : vector<16x1xf32> to vector<16x392xf32>
    %18 = arith.subf %5, %17 : vector<16x392xf32>
    %cst_9 = arith.constant 9.99999974E-6 : f32
    %19 = vector.broadcast %cst_9 : f32 to vector<16x1xf32>
    %20 = arith.addf %16, %19 : vector<16x1xf32>
    %21 = math.rsqrt %20 : vector<16x1xf32>
    %22 = vector.broadcast %21 : vector<16x1xf32> to vector<16x392xf32>
    %23 = arith.mulf %18, %22 : vector<16x392xf32>
    %cst_10 = arith.constant 0.000000e+00 : f32
    %24 = vector.broadcast %cst_10 : f32 to vector<16x392xf32>
    %25 = arith.maximumf %23, %24 : vector<16x392xf32>
    %26 = vector.extract_strided_slice %25 {offsets = [0, 0], sizes = [8, 392], strides = [1, 1]} : vector<16x392xf32> to vector<8x392xf32>
    %c0_11 = arith.constant 0 : index
    %c0_12 = arith.constant 0 : index
    %27 = vector.load %arg4[%c0_11, %c0_12] : memref<8x392xf32, #tpu.memory_space<vmem>>, vector<8x392xf32>
    tpu.vector_store %arg4[%c0_11, %c0_12], %26 {strides = array<i32>} : memref<8x392xf32, #tpu.memory_space<vmem>>, vector<8x392xf32>,
    %28 = vector.extract_strided_slice %25 {offsets = [8, 0], sizes = [8, 392], strides = [1, 1]} : vector<16x392xf32> to vector<8x392xf32>
    %c0_13 = arith.constant 0 : index
    %c0_14 = arith.constant 0 : index
    %29 = vector.load %arg5[%c0_13, %c0_14] : memref<8x392xf32, #tpu.memory_space<vmem>>, vector<8x392xf32>
    tpu.vector_store %arg5[%c0_13, %c0_14], %28 {strides = array<i32>} : memref<8x392xf32, #tpu.memory_space<vmem>>, vector<8x392xf32>,
    return
  }
  func.func @transform_0(%arg0: i32) -> (i32, i32) {
    %c0_i32 = arith.constant 0 : i32
    %c0_i32_0 = arith.constant 0 : i32
    %c0_i32_1 = arith.constant 0 : i32
    return %c0_i32, %c0_i32_0 : i32, i32
  }
  func.func @transform_1(%arg0: i32) -> (i32, i32) {
    %c0_i32 = arith.constant 0 : i32
    %c0_i32_0 = arith.constant 0 : i32
    %c0_i32_1 = arith.constant 0 : i32
    return %c0_i32, %c0_i32_0 : i32, i32
  }
  func.func @transform_2(%arg0: i32) -> (i32, i32) {
    %c0_i32 = arith.constant 0 : i32
    %c0_i32_0 = arith.constant 0 : i32
    %c0_i32_1 = arith.constant 0 : i32
    return %c0_i32, %c0_i32_0 : i32, i32
  }
  func.func @transform_3(%arg0: i32) -> (i32, i32) {
    %c0_i32 = arith.constant 0 : i32
    %c0_i32_0 = arith.constant 0 : i32
    %c0_i32_1 = arith.constant 0 : i32
    return %c0_i32, %c0_i32_0 : i32, i32
  }
  func.func @transform_4(%arg0: i32) -> (i32, i32) {
    %c0_i32 = arith.constant 0 : i32
    %c0_i32_0 = arith.constant 0 : i32
    %c0_i32_1 = arith.constant 0 : i32
    return %c0_i32, %c0_i32_0 : i32, i32
  }
}

module attributes {stable_mosaic.version = 11 : i64} {
  func.func @conv_block_kernel(%arg0: i32, %arg1: memref<144x50xf32, #tpu.memory_space<vmem>>, %arg2: memref<16x144xf32, #tpu.memory_space<vmem>>, %arg3: memref<16x1xf32, #tpu.memory_space<vmem>>, %arg4: memref<8x50xf32, #tpu.memory_space<vmem>>, %arg5: memref<8x50xf32, #tpu.memory_space<vmem>>) attributes {dimension_semantics = [#tpu.dimension_semantics<arbitrary>], iteration_bounds = array<i64: 1>, scalar_prefetch = 0 : i64, scratch_operands = 0 : i64, tpu.core_type = #tpu.core_type<tc>, window_params = [{pipeline_mode = #tpu.pipeline_mode<synchronous>, transform_indices = @transform_0, window_bounds = array<i64: 144, 50>}, {pipeline_mode = #tpu.pipeline_mode<synchronous>, transform_indices = @transform_1, window_bounds = array<i64: 16, 144>}, {pipeline_mode = #tpu.pipeline_mode<synchronous>, transform_indices = @transform_2, window_bounds = array<i64: 16, 1>}, {pipeline_mode = #tpu.pipeline_mode<synchronous>, transform_indices = @transform_3, window_bounds = array<i64: 8, 50>}, {pipeline_mode = #tpu.pipeline_mode<synchronous>, transform_indices = @transform_4, window_bounds = array<i64: 8, 50>}]} {
    %c0 = arith.constant 0 : index
    %c0_0 = arith.constant 0 : index
    %0 = vector.load %arg2[%c0, %c0_0] : memref<16x144xf32, #tpu.memory_space<vmem>>, vector<16x144xf32>
    %c0_1 = arith.constant 0 : index
    %c0_2 = arith.constant 0 : index
    %1 = vector.load %arg1[%c0_1, %c0_2] : memref<144x50xf32, #tpu.memory_space<vmem>>, vector<144x50xf32>
    %cst = arith.constant dense<0.000000e+00> : vector<16x50xf32>
    %2 = tpu.matmul %0, %1, %cst {dimension_numbers = #tpu.dot_dimension_numbers<[1], [0], [0], [1], [0, 0, 1, 1], [], []>} : vector<16x144xf32>, vector<144x50xf32>, vector<16x50xf32> -> vector<16x50xf32>
    %c0_3 = arith.constant 0 : index
    %c0_4 = arith.constant 0 : index
    %3 = vector.load %arg3[%c0_3, %c0_4] : memref<16x1xf32, #tpu.memory_space<vmem>>, vector<16x1xf32>
    %4 = vector.broadcast %3 : vector<16x1xf32> to vector<16x50xf32>
    %5 = arith.addf %2, %4 : vector<16x50xf32>
    %cst_5 = arith.constant dense<0.000000e+00> : vector<16xf32>
    %6 = vector.multi_reduction <add>, %5, %cst_5 [1] : vector<16x50xf32> to vector<16xf32>
    %7 = vector.shape_cast %6 : vector<16xf32> to vector<16x1xf32>
    %cst_6 = arith.constant 5.000000e+01 : f32
    %8 = vector.broadcast %cst_6 : f32 to vector<16x1xf32>
    %9 = arith.divf %7, %8 : vector<16x1xf32>
    %10 = vector.broadcast %9 : vector<16x1xf32> to vector<16x50xf32>
    %11 = arith.subf %5, %10 : vector<16x50xf32>
    %12 = arith.mulf %11, %11 : vector<16x50xf32>
    %cst_7 = arith.constant dense<0.000000e+00> : vector<16xf32>
    %13 = vector.multi_reduction <add>, %12, %cst_7 [1] : vector<16x50xf32> to vector<16xf32>
    %14 = vector.shape_cast %13 : vector<16xf32> to vector<16x1xf32>
    %cst_8 = arith.constant 5.000000e+01 : f32
    %15 = vector.broadcast %cst_8 : f32 to vector<16x1xf32>
    %16 = arith.divf %14, %15 : vector<16x1xf32>
    %17 = vector.broadcast %9 : vector<16x1xf32> to vector<16x50xf32>
    %18 = arith.subf %5, %17 : vector<16x50xf32>
    %cst_9 = arith.constant 9.99999974E-6 : f32
    %19 = vector.broadcast %cst_9 : f32 to vector<16x1xf32>
    %20 = arith.addf %16, %19 : vector<16x1xf32>
    %21 = math.rsqrt %20 : vector<16x1xf32>
    %22 = vector.broadcast %21 : vector<16x1xf32> to vector<16x50xf32>
    %23 = arith.mulf %18, %22 : vector<16x50xf32>
    %cst_10 = arith.constant 0.000000e+00 : f32
    %24 = vector.broadcast %cst_10 : f32 to vector<16x50xf32>
    %25 = arith.maximumf %23, %24 : vector<16x50xf32>
    %26 = vector.extract_strided_slice %25 {offsets = [0, 0], sizes = [8, 50], strides = [1, 1]} : vector<16x50xf32> to vector<8x50xf32>
    %c0_11 = arith.constant 0 : index
    %c0_12 = arith.constant 0 : index
    %27 = vector.load %arg4[%c0_11, %c0_12] : memref<8x50xf32, #tpu.memory_space<vmem>>, vector<8x50xf32>
    tpu.vector_store %arg4[%c0_11, %c0_12], %26 {strides = array<i32>} : memref<8x50xf32, #tpu.memory_space<vmem>>, vector<8x50xf32>,
    %28 = vector.extract_strided_slice %25 {offsets = [8, 0], sizes = [8, 50], strides = [1, 1]} : vector<16x50xf32> to vector<8x50xf32>
    %c0_13 = arith.constant 0 : index
    %c0_14 = arith.constant 0 : index
    %29 = vector.load %arg5[%c0_13, %c0_14] : memref<8x50xf32, #tpu.memory_space<vmem>>, vector<8x50xf32>
    tpu.vector_store %arg5[%c0_13, %c0_14], %28 {strides = array<i32>} : memref<8x50xf32, #tpu.memory_space<vmem>>, vector<8x50xf32>,
    return
  }
  func.func @transform_0(%arg0: i32) -> (i32, i32) {
    %c0_i32 = arith.constant 0 : i32
    %c0_i32_0 = arith.constant 0 : i32
    %c0_i32_1 = arith.constant 0 : i32
    return %c0_i32, %c0_i32_0 : i32, i32
  }
  func.func @transform_1(%arg0: i32) -> (i32, i32) {
    %c0_i32 = arith.constant 0 : i32
    %c0_i32_0 = arith.constant 0 : i32
    %c0_i32_1 = arith.constant 0 : i32
    return %c0_i32, %c0_i32_0 : i32, i32
  }
  func.func @transform_2(%arg0: i32) -> (i32, i32) {
    %c0_i32 = arith.constant 0 : i32
    %c0_i32_0 = arith.constant 0 : i32
    %c0_i32_1 = arith.constant 0 : i32
    return %c0_i32, %c0_i32_0 : i32, i32
  }
  func.func @transform_3(%arg0: i32) -> (i32, i32) {
    %c0_i32 = arith.constant 0 : i32
    %c0_i32_0 = arith.constant 0 : i32
    %c0_i32_1 = arith.constant 0 : i32
    return %c0_i32, %c0_i32_0 : i32, i32
  }
  func.func @transform_4(%arg0: i32) -> (i32, i32) {
    %c0_i32 = arith.constant 0 : i32
    %c0_i32_0 = arith.constant 0 : i32
    %c0_i32_1 = arith.constant 0 : i32
    return %c0_i32, %c0_i32_0 : i32, i32
  }
}

module attributes {stable_mosaic.version = 11 : i64} {
  func.func @mlp_head_kernel(%arg0: i32, %arg1: memref<2x64xf32, #tpu.memory_space<vmem>>, %arg2: memref<64x64xf32, #tpu.memory_space<vmem>>, %arg3: memref<1x64xf32, #tpu.memory_space<vmem>>, %arg4: memref<64x64xf32, #tpu.memory_space<vmem>>, %arg5: memref<1x64xf32, #tpu.memory_space<vmem>>, %arg6: memref<64x20xf32, #tpu.memory_space<vmem>>, %arg7: memref<1x20xf32, #tpu.memory_space<vmem>>, %arg8: memref<2x10xf32, #tpu.memory_space<vmem>>) attributes {dimension_semantics = [#tpu.dimension_semantics<arbitrary>], iteration_bounds = array<i64: 1>, scalar_prefetch = 0 : i64, scratch_operands = 0 : i64, tpu.core_type = #tpu.core_type<tc>, window_params = [{pipeline_mode = #tpu.pipeline_mode<synchronous>, transform_indices = @transform_0, window_bounds = array<i64: 2, 64>}, {pipeline_mode = #tpu.pipeline_mode<synchronous>, transform_indices = @transform_1, window_bounds = array<i64: 64, 64>}, {pipeline_mode = #tpu.pipeline_mode<synchronous>, transform_indices = @transform_2, window_bounds = array<i64: 1, 64>}, {pipeline_mode = #tpu.pipeline_mode<synchronous>, transform_indices = @transform_3, window_bounds = array<i64: 64, 64>}, {pipeline_mode = #tpu.pipeline_mode<synchronous>, transform_indices = @transform_4, window_bounds = array<i64: 1, 64>}, {pipeline_mode = #tpu.pipeline_mode<synchronous>, transform_indices = @transform_5, window_bounds = array<i64: 64, 20>}, {pipeline_mode = #tpu.pipeline_mode<synchronous>, transform_indices = @transform_6, window_bounds = array<i64: 1, 20>}, {pipeline_mode = #tpu.pipeline_mode<synchronous>, transform_indices = @transform_7, window_bounds = array<i64: 2, 10>}]} {
    %c0 = arith.constant 0 : index
    %c0_0 = arith.constant 0 : index
    %0 = vector.load %arg1[%c0, %c0_0] : memref<2x64xf32, #tpu.memory_space<vmem>>, vector<2x64xf32>
    %c0_1 = arith.constant 0 : index
    %c0_2 = arith.constant 0 : index
    %1 = vector.load %arg2[%c0_1, %c0_2] : memref<64x64xf32, #tpu.memory_space<vmem>>, vector<64x64xf32>
    %cst = arith.constant dense<0.000000e+00> : vector<2x64xf32>
    %2 = tpu.matmul %0, %1, %cst {dimension_numbers = #tpu.dot_dimension_numbers<[1], [0], [0], [1], [0, 0, 1, 1], [], []>} : vector<2x64xf32>, vector<64x64xf32>, vector<2x64xf32> -> vector<2x64xf32>
    %c0_3 = arith.constant 0 : index
    %c0_4 = arith.constant 0 : index
    %3 = vector.load %arg3[%c0_3, %c0_4] : memref<1x64xf32, #tpu.memory_space<vmem>>, vector<1x64xf32>
    %4 = vector.broadcast %3 : vector<1x64xf32> to vector<2x64xf32>
    %5 = arith.addf %2, %4 : vector<2x64xf32>
    %cst_5 = arith.constant dense<0.000000e+00> : vector<64xf32>
    %6 = vector.multi_reduction <add>, %5, %cst_5 [0] : vector<2x64xf32> to vector<64xf32>
    %7 = vector.shape_cast %6 : vector<64xf32> to vector<1x64xf32>
    %cst_6 = arith.constant 2.000000e+00 : f32
    %8 = vector.broadcast %cst_6 : f32 to vector<1x64xf32>
    %9 = arith.divf %7, %8 : vector<1x64xf32>
    %10 = vector.broadcast %9 : vector<1x64xf32> to vector<2x64xf32>
    %11 = arith.subf %5, %10 : vector<2x64xf32>
    %12 = arith.mulf %11, %11 : vector<2x64xf32>
    %cst_7 = arith.constant dense<0.000000e+00> : vector<64xf32>
    %13 = vector.multi_reduction <add>, %12, %cst_7 [0] : vector<2x64xf32> to vector<64xf32>
    %14 = vector.shape_cast %13 : vector<64xf32> to vector<1x64xf32>
    %cst_8 = arith.constant 2.000000e+00 : f32
    %15 = vector.broadcast %cst_8 : f32 to vector<1x64xf32>
    %16 = arith.divf %14, %15 : vector<1x64xf32>
    %17 = vector.broadcast %9 : vector<1x64xf32> to vector<2x64xf32>
    %18 = arith.subf %5, %17 : vector<2x64xf32>
    %cst_9 = arith.constant 9.99999974E-6 : f32
    %19 = vector.broadcast %cst_9 : f32 to vector<1x64xf32>
    %20 = arith.addf %16, %19 : vector<1x64xf32>
    %21 = math.rsqrt %20 : vector<1x64xf32>
    %22 = vector.broadcast %21 : vector<1x64xf32> to vector<2x64xf32>
    %23 = arith.mulf %18, %22 : vector<2x64xf32>
    %cst_10 = arith.constant 0.000000e+00 : f32
    %24 = vector.broadcast %cst_10 : f32 to vector<2x64xf32>
    %25 = arith.maximumf %23, %24 : vector<2x64xf32>
    %c0_11 = arith.constant 0 : index
    %c0_12 = arith.constant 0 : index
    %26 = vector.load %arg4[%c0_11, %c0_12] : memref<64x64xf32, #tpu.memory_space<vmem>>, vector<64x64xf32>
    %cst_13 = arith.constant dense<0.000000e+00> : vector<2x64xf32>
    %27 = tpu.matmul %25, %26, %cst_13 {dimension_numbers = #tpu.dot_dimension_numbers<[1], [0], [0], [1], [0, 0, 1, 1], [], []>} : vector<2x64xf32>, vector<64x64xf32>, vector<2x64xf32> -> vector<2x64xf32>
    %c0_14 = arith.constant 0 : index
    %c0_15 = arith.constant 0 : index
    %28 = vector.load %arg5[%c0_14, %c0_15] : memref<1x64xf32, #tpu.memory_space<vmem>>, vector<1x64xf32>
    %29 = vector.broadcast %28 : vector<1x64xf32> to vector<2x64xf32>
    %30 = arith.addf %27, %29 : vector<2x64xf32>
    %cst_16 = arith.constant dense<0.000000e+00> : vector<64xf32>
    %31 = vector.multi_reduction <add>, %30, %cst_16 [0] : vector<2x64xf32> to vector<64xf32>
    %32 = vector.shape_cast %31 : vector<64xf32> to vector<1x64xf32>
    %cst_17 = arith.constant 2.000000e+00 : f32
    %33 = vector.broadcast %cst_17 : f32 to vector<1x64xf32>
    %34 = arith.divf %32, %33 : vector<1x64xf32>
    %35 = vector.broadcast %34 : vector<1x64xf32> to vector<2x64xf32>
    %36 = arith.subf %30, %35 : vector<2x64xf32>
    %37 = arith.mulf %36, %36 : vector<2x64xf32>
    %cst_18 = arith.constant dense<0.000000e+00> : vector<64xf32>
    %38 = vector.multi_reduction <add>, %37, %cst_18 [0] : vector<2x64xf32> to vector<64xf32>
    %39 = vector.shape_cast %38 : vector<64xf32> to vector<1x64xf32>
    %cst_19 = arith.constant 2.000000e+00 : f32
    %40 = vector.broadcast %cst_19 : f32 to vector<1x64xf32>
    %41 = arith.divf %39, %40 : vector<1x64xf32>
    %42 = vector.broadcast %34 : vector<1x64xf32> to vector<2x64xf32>
    %43 = arith.subf %30, %42 : vector<2x64xf32>
    %cst_20 = arith.constant 9.99999974E-6 : f32
    %44 = vector.broadcast %cst_20 : f32 to vector<1x64xf32>
    %45 = arith.addf %41, %44 : vector<1x64xf32>
    %46 = math.rsqrt %45 : vector<1x64xf32>
    %47 = vector.broadcast %46 : vector<1x64xf32> to vector<2x64xf32>
    %48 = arith.mulf %43, %47 : vector<2x64xf32>
    %cst_21 = arith.constant 0.000000e+00 : f32
    %49 = vector.broadcast %cst_21 : f32 to vector<2x64xf32>
    %50 = arith.maximumf %48, %49 : vector<2x64xf32>
    %c0_22 = arith.constant 0 : index
    %c0_23 = arith.constant 0 : index
    %51 = vector.load %arg6[%c0_22, %c0_23] : memref<64x20xf32, #tpu.memory_space<vmem>>, vector<64x20xf32>
    %cst_24 = arith.constant dense<0.000000e+00> : vector<2x20xf32>
    %52 = tpu.matmul %50, %51, %cst_24 {dimension_numbers = #tpu.dot_dimension_numbers<[1], [0], [0], [1], [0, 0, 1, 1], [], []>} : vector<2x64xf32>, vector<64x20xf32>, vector<2x20xf32> -> vector<2x20xf32>
    %c0_25 = arith.constant 0 : index
    %c0_26 = arith.constant 0 : index
    %53 = vector.load %arg7[%c0_25, %c0_26] : memref<1x20xf32, #tpu.memory_space<vmem>>, vector<1x20xf32>
    %54 = vector.broadcast %53 : vector<1x20xf32> to vector<2x20xf32>
    %55 = arith.addf %52, %54 : vector<2x20xf32>
    %56 = vector.extract_strided_slice %55 {offsets = [0, 0], sizes = [2, 10], strides = [1, 1]} : vector<2x20xf32> to vector<2x10xf32>
    %57 = vector.extract_strided_slice %55 {offsets = [0, 10], sizes = [2, 10], strides = [1, 1]} : vector<2x20xf32> to vector<2x10xf32>
    %58 = arith.mulf %56, %56 : vector<2x10xf32>
    %59 = arith.mulf %57, %57 : vector<2x10xf32>
    %60 = arith.addf %58, %59 : vector<2x10xf32>
    %cst_27 = arith.constant dense<0xFF800000> : vector<2xf32>
    %61 = vector.multi_reduction <maximumf>, %60, %cst_27 [1] : vector<2x10xf32> to vector<2xf32>
    %62 = vector.shape_cast %61 : vector<2xf32> to vector<2x1xf32>
    %63 = vector.broadcast %62 : vector<2x1xf32> to vector<2x10xf32>
    %64 = arith.subf %60, %63 : vector<2x10xf32>
    %65 = math.exp %64 : vector<2x10xf32>
    %66 = vector.broadcast %62 : vector<2x1xf32> to vector<2x10xf32>
    %67 = arith.subf %60, %66 : vector<2x10xf32>
    %cst_28 = arith.constant dense<0.000000e+00> : vector<2xf32>
    %68 = vector.multi_reduction <add>, %65, %cst_28 [1] : vector<2x10xf32> to vector<2xf32>
    %69 = vector.shape_cast %68 : vector<2xf32> to vector<2x1xf32>
    %70 = math.log %69 : vector<2x1xf32>
    %71 = vector.broadcast %70 : vector<2x1xf32> to vector<2x10xf32>
    %72 = arith.subf %67, %71 : vector<2x10xf32>
    %c0_29 = arith.constant 0 : index
    %c0_30 = arith.constant 0 : index
    %73 = vector.load %arg8[%c0_29, %c0_30] : memref<2x10xf32, #tpu.memory_space<vmem>>, vector<2x10xf32>
    tpu.vector_store %arg8[%c0_29, %c0_30], %72 {strides = array<i32>} : memref<2x10xf32, #tpu.memory_space<vmem>>, vector<2x10xf32>,
    return
  }
  func.func @transform_0(%arg0: i32) -> (i32, i32) {
    %c0_i32 = arith.constant 0 : i32
    %c0_i32_0 = arith.constant 0 : i32
    %c0_i32_1 = arith.constant 0 : i32
    return %c0_i32, %c0_i32_0 : i32, i32
  }
  func.func @transform_1(%arg0: i32) -> (i32, i32) {
    %c0_i32 = arith.constant 0 : i32
    %c0_i32_0 = arith.constant 0 : i32
    %c0_i32_1 = arith.constant 0 : i32
    return %c0_i32, %c0_i32_0 : i32, i32
  }
  func.func @transform_2(%arg0: i32) -> (i32, i32) {
    %c0_i32 = arith.constant 0 : i32
    %c0_i32_0 = arith.constant 0 : i32
    %c0_i32_1 = arith.constant 0 : i32
    return %c0_i32, %c0_i32_0 : i32, i32
  }
  func.func @transform_3(%arg0: i32) -> (i32, i32) {
    %c0_i32 = arith.constant 0 : i32
    %c0_i32_0 = arith.constant 0 : i32
    %c0_i32_1 = arith.constant 0 : i32
    return %c0_i32, %c0_i32_0 : i32, i32
  }
  func.func @transform_4(%arg0: i32) -> (i32, i32) {
    %c0_i32 = arith.constant 0 : i32
    %c0_i32_0 = arith.constant 0 : i32
    %c0_i32_1 = arith.constant 0 : i32
    return %c0_i32, %c0_i32_0 : i32, i32
  }
  func.func @transform_5(%arg0: i32) -> (i32, i32) {
    %c0_i32 = arith.constant 0 : i32
    %c0_i32_0 = arith.constant 0 : i32
    %c0_i32_1 = arith.constant 0 : i32
    return %c0_i32, %c0_i32_0 : i32, i32
  }
  func.func @transform_6(%arg0: i32) -> (i32, i32) {
    %c0_i32 = arith.constant 0 : i32
    %c0_i32_0 = arith.constant 0 : i32
    %c0_i32_1 = arith.constant 0 : i32
    return %c0_i32, %c0_i32_0 : i32, i32
  }
  func.func @transform_7(%arg0: i32) -> (i32, i32) {
    %c0_i32 = arith.constant 0 : i32
    %c0_i32_0 = arith.constant 0 : i32
    %c0_i32_1 = arith.constant 0 : i32
    return %c0_i32, %c0_i32_0 : i32, i32
  }
}

</mosaic_0001>

<llo_original>
// kernel: neg.5
$region0: #{neg.5}
  #allocation0 [shape = 's32[1]{0}', space=sflag, size = 0x4, scoped, tag = 'scoped memory for neg.5']
  %s0 = inlined_call_operand.vmem [shape: f32[8,9], index: 0, kind: input, shape index: {}]
  %s1 = inlined_call_operand.vmem [shape: f32[8,9], index: 1, kind: output, shape index: {}]
  %v2 = vld [vmem:[%s0] sm:$0xff]
  %3 = xla_tuple %v2
  %4 = xla_tuple %3
  %v5 = vxor.u32 %v2, 2147483648
  %6 = xla_tuple %v5
  %7 = vst [vmem:[%s1] sm:$0xff] %v5

// kernel: forward.3
$region0: #{forward.3}
  #allocation0 [shape = 'u32[]', space=smem, size = 0x4, offset = 0x4, fixed_abs, tag = 'smem constant byte address 0x4 - core index']
  #allocation1 [shape = 'u32[144,128]{1,0:T(1,128)}', space=vmem, size = 0x12000, scoped, tag = 'internal scratch']
  %s0 = inlined_call_operand.vmem [shape: f32[18,392], index: 0, kind: input, shape index: {}]
  %s1 = inlined_call_operand.vmem [shape: f32[16,18], index: 1, kind: input, shape index: {}]
  %s2 = inlined_call_operand.vmem [shape: f32[16,1], index: 2, kind: input, shape index: {}]
  %s3 = inlined_call_operand.vmem [shape: f32[8,392], index: 3, kind: output, shape index: {0}]
  %s4 = inlined_call_operand.vmem [shape: f32[8,392], index: 4, kind: output, shape index: {1}]
  %5 = xla_tuple %s3, %s4
  %s6 = sld [smem:[#allocation0]]
  $region30: #{forward.3} parent=0
    _
  %s8 = ssub.s32 1, %s6
  %s9 = scalar_select 0, %s8, %s6
  // Predicated region
  $region2: #{forward.3} parent=0 // pred_check
    _
  $region3: #{forward.3} parent=0 // pred_check_branch
    %11 = sbr.rel (0) target = $region5
  $region4: #{forward.3} parent=0 // pred_region
    _
  $region5: #{forward.3} parent=0 // pred_fallthru
    _
  // Predicated region
  $region6: #{forward.3} parent=0 // pred_check
    _
  $region7: #{forward.3} parent=0 // pred_check_branch
    %13 = sbr.rel (0) target = $region9
  $region8: #{forward.3} parent=0 // pred_region
    _
  $region9: #{forward.3} parent=0 // pred_fallthru
    _
  // Predicated region
  $region10: #{forward.3} parent=0 // pred_check
    _
  $region11: #{forward.3} parent=0 // pred_check_branch
    %15 = sbr.rel (0) target = $region13
  $region12: #{forward.3} parent=0 // pred_region
    _
  $region13: #{forward.3} parent=0 // pred_fallthru
    _
  %v16 = vld [vmem:[%s1] sm:$0xff]
  %v17 = vld [vmem:[%s1 + $0x8] sm:$0xff]
  %v18 = vld [vmem:[%s0] sm:$0xff]
  %v19 = vld [vmem:[%s0 + $0x8] sm:$0xff]
  %v20 = vld [vmem:[%s0 + $0x10] sm:$0xff]
  %v21 = vld [vmem:[%s0 + $0x18] sm:$0xff]
  %v22 = vld [vmem:[%s0 + $0x20] sm:$0xff]
  %v23 = vld [vmem:[%s0 + $0x28] sm:$0xff]
  %v24 = vld [vmem:[%s0 + $0x30] sm:$0xff]
  %v25 = vld [vmem:[%s0 + $0x38] sm:$0xff]
  %v26 = vld [vmem:[%s0 + $0x40] sm:$0x3]
  %v27 = vld [vmem:[%s0 + $0x48] sm:$0x3]
  %v28 = vld [vmem:[%s0 + $0x50] sm:$0x3]
  %v29 = vld [vmem:[%s0 + $0x58] sm:$0x3]
  %v30 = vld [vmem:[%s2] sm:$0xff]
  %v31 = vld [vmem:[%s2 + $0x8] sm:$0xff]
  %33 = vset.pattern.permute.xlu0 0
  %34 = vperm.xlu0 %33, %v30
  %v35 = vpop.permute.xlu0 %34
  %38 = vset.pattern.permute.xlu0 0
  %39 = vperm.xlu0 %38, %v31
  %v40 = vpop.permute.xlu0 %39
  %vm42 = vcmask 146432
  %v44 = vsel %vm42, %v16, 0
  %v47 = vsel %vm42, %v17, 0
  %vm49 = vcmask 1041408
  %v51 = vsel %vm49, %v26, 0
  %v54 = vsel %vm49, %v27, 0
  %v57 = vsel %vm49, %v28, 0
  %v60 = vsel %vm49, %v29, 0
  %62 = vmatprep.subr.mxu0 0.0
  %63 = vmatpush1.msra.mxu0 0.0
  %64 = vmatprep.subr.mxu0 0.0
  %65 = vmatpush1.msra.mxu0 0.0
  %66 = vmatprep.subr.mxu0 0.0
  %67 = vmatpush1.msra.mxu0 0.0
  %68 = vmatprep.subr.mxu0 0.0
  %69 = vmatpush1.msra.mxu0 0.0
  %70 = vmatprep.subr.mxu0 0.0
  %71 = vmatpush1.msra.mxu0 0.0
  %72 = vmatprep.subr.mxu0 0.0
  %73 = vmatpush1.msra.mxu0 0.0
  %74 = vmatprep.subr.mxu0 0.0
  %75 = vmatpush1.msra.mxu0 0.0
  %76 = vmatprep.subr.mxu0 0.0
  %77 = vmatpush1.msra.mxu0 0.0
  %78 = vmatprep.subr.mxu0 0.0
  %79 = vmatpush1.msra.mxu0 0.0
  %80 = vmatprep.subr.mxu0 0.0
  %81 = vmatpush1.msra.mxu0 0.0
  %82 = vmatprep.subr.mxu0 0.0
  %83 = vmatpush1.msra.mxu0 0.0
  %84 = vmatprep.subr.mxu0 0.0
  %85 = vmatpush1.msra.mxu0 0.0
  %86 = vmatprep.subr.mxu0 0.0
  %87 = vmatpush1.msra.mxu0 0.0
  %88 = vmatprep.subr.mxu0 %v54
  %89 = vmatpush1.msra.mxu0 %v51
  %90 = vmatprep.subr.mxu0 %v23
  %91 = vmatpush1.msra.mxu0 %v22
  %92 = vmatprep.subr.mxu0 %v19
  %93 = vmatpush1.msra.mxu0 %v18
  %94 = vmatprep.subr.mxu0 0.0
  %95 = vmatpush2.msra.mxu0 0.0
  %96 = vmatprep.subr.mxu0 0.0
  %97 = vmatpush2.msra.mxu0 0.0
  %98 = vmatprep.subr.mxu0 0.0
  %99 = vmatpush2.msra.mxu0 0.0
  %100 = vmatprep.subr.mxu0 0.0
  %101 = vmatpush2.msra.mxu0 0.0
  %102 = vmatprep.subr.mxu0 0.0
  %103 = vmatpush2.msra.mxu0 0.0
  %104 = vmatprep.subr.mxu0 0.0
  %105 = vmatpush2.msra.mxu0 0.0
  %106 = vmatprep.subr.mxu0 0.0
  %107 = vmatpush2.msra.mxu0 0.0
  %108 = vmatprep.subr.mxu0 0.0
  %109 = vmatpush2.msra.mxu0 0.0
  %110 = vmatprep.subr.mxu0 0.0
  %111 = vmatpush2.msra.mxu0 0.0
  %112 = vmatprep.subr.mxu0 0.0
  %113 = vmatpush2.msra.mxu0 0.0
  %114 = vmatprep.subr.mxu0 0.0
  %115 = vmatpush2.msra.mxu0 0.0
  %116 = vmatprep.subr.mxu0 0.0
  %117 = vmatpush2.msra.mxu0 0.0
  %118 = vmatprep.subr.mxu0 0.0
  %119 = vmatpush2.msra.mxu0 0.0
  %120 = vmatprep.subr.mxu0 0.0
  %121 = vmatpush2.msra.mxu0 0.0
  %122 = vmatprep.subr.mxu0 0.0
  %123 = vmatpush2.msra.mxu0 0.0
  %124 = vmatprep.subr.mxu0 0.0
  %125 = vmatpush2.msra.mxu0 0.0
  %126 = vmatprep.mubr.f32.mxu0 0.0
  %127 = vmatmul.mubr.f32.gmra.mxu0 %v44
  %v128 = vpop.f32.mrf.mxu0
  %v129 = vadd.f32 %v35, %v128
  %v130 = vpop.f32.mrf.mxu0
  %v131 = vadd.f32 %v35, %v130
  %132 = vmatprep.mubr.f32.mxu0 0.0
  %133 = vmatmul.mubr.f32.gmra.mxu0 %v47
  %v134 = vpop.f32.mrf.mxu0
  %v135 = vadd.f32 %v40, %v134
  %v136 = vpop.f32.mrf.mxu0
  %v137 = vadd.f32 %v40, %v136
  %138 = vdwg.mxu0
  %139 = vmatprep.subr.mxu0 0.0
  %140 = vmatpush1.msra.mxu0 0.0
  %141 = vmatprep.subr.mxu0 0.0
  %142 = vmatpush1.msra.mxu0 0.0
  %143 = vmatprep.subr.mxu0 0.0
  %144 = vmatpush1.msra.mxu0 0.0
  %145 = vmatprep.subr.mxu0 0.0
  %146 = vmatpush1.msra.mxu0 0.0
  %147 = vmatprep.subr.mxu0 0.0
  %148 = vmatpush1.msra.mxu0 0.0
  %149 = vmatprep.subr.mxu0 0.0
  %150 = vmatpush1.msra.mxu0 0.0
  %151 = vmatprep.subr.mxu0 0.0
  %152 = vmatpush1.msra.mxu0 0.0
  %153 = vmatprep.subr.mxu0 0.0
  %154 = vmatpush1.msra.mxu0 0.0
  %155 = vmatprep.subr.mxu0 0.0
  %156 = vmatpush1.msra.mxu0 0.0
  %157 = vmatprep.subr.mxu0 0.0
  %158 = vmatpush1.msra.mxu0 0.0
  %159 = vmatprep.subr.mxu0 0.0
  %160 = vmatpush1.msra.mxu0 0.0
  %161 = vmatprep.subr.mxu0 0.0
  %162 = vmatpush1.msra.mxu0 0.0
  %163 = vmatprep.subr.mxu0 0.0
  %164 = vmatpush1.msra.mxu0 0.0
  %165 = vmatprep.subr.mxu0 %v60
  %166 = vmatpush1.msra.mxu0 %v57
  %167 = vmatprep.subr.mxu0 %v25
  %168 = vmatpush1.msra.mxu0 %v24
  %169 = vmatprep.subr.mxu0 %v21
  %170 = vmatpush1.msra.mxu0 %v20
  %171 = vmatprep.subr.mxu0 0.0
  %172 = vmatpush2.msra.mxu0 0.0
  %173 = vmatprep.subr.mxu0 0.0
  %174 = vmatpush2.msra.mxu0 0.0
  %175 = vmatprep.subr.mxu0 0.0
  %176 = vmatpush2.msra.mxu0 0.0
  %177 = vmatprep.subr.mxu0 0.0
  %178 = vmatpush2.msra.mxu0 0.0
  %179 = vmatprep.subr.mxu0 0.0
  %180 = vmatpush2.msra.mxu0 0.0
  %181 = vmatprep.subr.mxu0 0.0
  %182 = vmatpush2.msra.mxu0 0.0
  %183 = vmatprep.subr.mxu0 0.0
  %184 = vmatpush2.msra.mxu0 0.0
  %185 = vmatprep.subr.mxu0 0.0
  %186 = vmatpush2.msra.mxu0 0.0
  %187 = vmatprep.subr.mxu0 0.0
  %188 = vmatpush2.msra.mxu0 0.0
  %189 = vmatprep.subr.mxu0 0.0
  %190 = vmatpush2.msra.mxu0 0.0
  %191 = vmatprep.subr.mxu0 0.0
  %192 = vmatpush2.msra.mxu0 0.0
  %193 = vmatprep.subr.mxu0 0.0
  %194 = vmatpush2.msra.mxu0 0.0
  %195 = vmatprep.subr.mxu0 0.0
  %196 = vmatpush2.msra.mxu0 0.0
  %197 = vmatprep.subr.mxu0 0.0
  %198 = vmatpush2.msra.mxu0 0.0
  %199 = vmatprep.subr.mxu0 0.0
  %200 = vmatpush2.msra.mxu0 0.0
  %201 = vmatprep.subr.mxu0 0.0
  %202 = vmatpush2.msra.mxu0 0.0
  %203 = vmatprep.mubr.f32.mxu0 0.0
  %204 = vmatmul.mubr.f32.gmra.mxu0 %v44
  %v205 = vpop.f32.mrf.mxu0
  %v206 = vadd.f32 %v35, %v205
  %v207 = vpop.f32.mrf.mxu0
  %v208 = vadd.f32 %v35, %v207
  %209 = vmatprep.mubr.f32.mxu0 0.0
  %210 = vmatmul.mubr.f32.gmra.mxu0 %v47
  %v211 = vpop.f32.mrf.mxu0
  %v212 = vadd.f32 %v40, %v211
  %v213 = vpop.f32.mrf.mxu0
  %v214 = vadd.f32 %v40, %v213
  %215 = vdwg.mxu0
  %v216 = vadd.f32 %v129, %v131
  %v217 = vadd.f32 %v216, %v206
  %vm218 = vcmask 64512
  %v219 = vsel %vm218, %v208, 0.0
  %v220 = vadd.f32 %v217, %v219
  %221 = vadd.xlane.f32.xlu0 %v220
  %v222 = vpop.xlane.xlu0 %221
  %v223 = vadd.f32 %v135, %v137
  %v224 = vadd.f32 %v223, %v212
  %v225 = vsel %vm218, %v214, 0.0
  %v226 = vadd.f32 %v224, %v225
  %227 = vadd.xlane.f32.xlu0 %v226
  %v228 = vpop.xlane.xlu0 %227
  %v229 = vrcp.pop 392.0
  %v230 = vmul.f32 %v222, %v229
  %v231 = vmul.f32 %v228, %v229
  %v232 = vsub.f32 %v129, %v230
  %v233 = vsub.f32 %v131, %v230
  %v234 = vsub.f32 %v206, %v230
  %v235 = vsub.f32 %v208, %v230
  %v236 = vsub.f32 %v135, %v231
  %v237 = vsub.f32 %v137, %v231
  %v238 = vsub.f32 %v212, %v231
  %v239 = vsub.f32 %v214, %v231
  %v240 = vmul.f32 %v232, %v232
  %v241 = vmul.f32 %v233, %v233
  %v242 = vmul.f32 %v234, %v234
  %v243 = vmul.f32 %v235, %v235
  %v244 = vmul.f32 %v236, %v236
  %v245 = vmul.f32 %v237, %v237
  %v246 = vmul.f32 %v238, %v238
  %v247 = vmul.f32 %v239, %v239
  %v248 = vadd.f32 %v240, %v241
  %v249 = vadd.f32 %v248, %v242
  %v250 = vsel %vm218, %v243, 0.0
  %v251 = vadd.f32 %v249, %v250
  %252 = vadd.xlane.f32.xlu0 %v251
  %v253 = vpop.xlane.xlu0 %252
  %v254 = vadd.f32 %v244, %v245
  %v255 = vadd.f32 %v254, %v246
  %v256 = vsel %vm218, %v247, 0.0
  %v257 = vadd.f32 %v255, %v256
  %258 = vadd.xlane.f32.xlu0 %v257
  %v259 = vpop.xlane.xlu0 %258
  %v260 = vmul.f32 %v253, %v229
  %v261 = vmul.f32 %v259, %v229
  %v262 = vadd.f32 %v260, 1e-05
  %v263 = vadd.f32 %v261, 1e-05
  %v264 = vrsqrt.pop %v262
  %v265 = vrsqrt.pop %v263
  %v266 = vmul.f32 %v232, %v264
  %v267 = vmul.f32 %v233, %v264
  %v268 = vmul.f32 %v234, %v264
  %v269 = vmul.f32 %v235, %v264
  %v270 = vmul.f32 %v236, %v265
  %v271 = vmul.f32 %v237, %v265
  %v272 = vmul.f32 %v238, %v265
  %v273 = vmul.f32 %v239, %v265
  %v274 = vmax.f32 %v266, 0.0
  %v275 = vmax.f32 %v267, 0.0
  %v276 = vmax.f32 %v268, 0.0
  %v277 = vmax.f32 %v269, 0.0
  %v278 = vmax.f32 %v270, 0.0
  %v279 = vmax.f32 %v271, 0.0
  %v280 = vmax.f32 %v272, 0.0
  %v281 = vmax.f32 %v273, 0.0
  %282 = vst [vmem:[%s3] sm:$0xff] %v274
  %283 = vst [vmem:[%s3 + $0x8] sm:$0xff] %v275
  %284 = vst [vmem:[%s3 + $0x10] sm:$0xff] %v276
  %285 = vst.msk [vmem:[%s3 + $0x18] sm:$0xff] %vm218, %v277
  %286 = vst [vmem:[%s4] sm:$0xff] %v278
  %287 = vst [vmem:[%s4 + $0x8] sm:$0xff] %v279
  %288 = vst [vmem:[%s4 + $0x10] sm:$0xff] %v280
  %289 = vst.msk [vmem:[%s4 + $0x18] sm:$0xff] %vm218, %v281
  // Predicated region
  $region14: #{forward.3} parent=0 // pred_check
    _
  $region15: #{forward.3} parent=0 // pred_check_branch
    %291 = sbr.rel (0) target = $region17
  $region16: #{forward.3} parent=0 // pred_region
    _
  $region17: #{forward.3} parent=0 // pred_fallthru
    _
  // Predicated region
  $region18: #{forward.3} parent=0 // pred_check
    _
  $region19: #{forward.3} parent=0 // pred_check_branch
    %293 = sbr.rel (0) target = $region21
  $region20: #{forward.3} parent=0 // pred_region
    _
  $region21: #{forward.3} parent=0 // pred_fallthru
    _
  // Predicated region
  $region22: #{forward.3} parent=0 // pred_check
    _
  $region23: #{forward.3} parent=0 // pred_check_branch
    %295 = sbr.rel (0) target = $region25
  $region24: #{forward.3} parent=0 // pred_region
    _
  $region25: #{forward.3} parent=0 // pred_fallthru
    _
  // Predicated region
  $region26: #{forward.3} parent=0 // pred_check
    _
  $region27: #{forward.3} parent=0 // pred_check_branch
    %297 = sbr.rel (0) target = $region29
  $region28: #{forward.3} parent=0 // pred_region
    _
  $region29: #{forward.3} parent=0 // pred_fallthru
    _

// kernel: neg.6
$region0: #{neg.6}
  #allocation0 [shape = 's32[1]{0}', space=sflag, size = 0x4, scoped, tag = 'scoped memory for neg.6']
  %s0 = inlined_call_operand.vmem [shape: f32[8,72], index: 0, kind: input, shape index: {}]
  %s1 = inlined_call_operand.vmem [shape: f32[8,72], index: 1, kind: output, shape index: {}]
  %v2 = vld [vmem:[%s0] sm:$0xff]
  %3 = xla_tuple %v2
  %4 = xla_tuple %3
  %v5 = vxor.u32 %v2, 2147483648
  %6 = xla_tuple %v5
  %7 = vst [vmem:[%s1] sm:$0xff] %v5

// kernel: forward.4
$region0: #{forward.4}
  #allocation0 [shape = 'u32[]', space=smem, size = 0x4, offset = 0x4, fixed_abs, tag = 'smem constant byte address 0x4 - core index']
  #allocation1 [shape = 'u32[144,128]{1,0:T(1,128)}', space=vmem, size = 0x12000, scoped, tag = 'internal scratch']
  %s0 = inlined_call_operand.vmem [shape: f32[144,50], index: 0, kind: input, shape index: {}]
  %s1 = inlined_call_operand.vmem [shape: f32[16,144], index: 1, kind: input, shape index: {}]
  %s2 = inlined_call_operand.vmem [shape: f32[16,1], index: 2, kind: input, shape index: {}]
  %s3 = inlined_call_operand.vmem [shape: f32[8,50], index: 3, kind: output, shape index: {0}]
  %s4 = inlined_call_operand.vmem [shape: f32[8,50], index: 4, kind: output, shape index: {1}]
  %5 = xla_tuple %s3, %s4
  %s6 = sld [smem:[#allocation0]]
  $region30: #{forward.4} parent=0
    _
  %s8 = ssub.s32 1, %s6
  %s9 = scalar_select 0, %s8, %s6
  // Predicated region
  $region2: #{forward.4} parent=0 // pred_check
    _
  $region3: #{forward.4} parent=0 // pred_check_branch
    %11 = sbr.rel (0) target = $region5
  $region4: #{forward.4} parent=0 // pred_region
    _
  $region5: #{forward.4} parent=0 // pred_fallthru
    _
  // Predicated region
  $region6: #{forward.4} parent=0 // pred_check
    _
  $region7: #{forward.4} parent=0 // pred_check_branch
    %13 = sbr.rel (0) target = $region9
  $region8: #{forward.4} parent=0 // pred_region
    _
  $region9: #{forward.4} parent=0 // pred_fallthru
    _
  // Predicated region
  $region10: #{forward.4} parent=0 // pred_check
    _
  $region11: #{forward.4} parent=0 // pred_check_branch
    %15 = sbr.rel (0) target = $region13
  $region12: #{forward.4} parent=0 // pred_region
    _
  $region13: #{forward.4} parent=0 // pred_fallthru
    _
  %v16 = vld [vmem:[%s1] sm:$0xff]
  %v17 = vld [vmem:[%s1 + $0x8] sm:$0xff]
  %v18 = vld [vmem:[%s1 + $0x10] sm:$0xff]
  %v19 = vld [vmem:[%s1 + $0x18] sm:$0xff]
  %v20 = vld [vmem:[%s0] sm:$0xff]
  %v21 = vld [vmem:[%s0 + $0x8] sm:$0xff]
  %v22 = vld [vmem:[%s0 + $0x10] sm:$0xff]
  %v23 = vld [vmem:[%s0 + $0x18] sm:$0xff]
  %v24 = vld [vmem:[%s0 + $0x20] sm:$0xff]
  %v25 = vld [vmem:[%s0 + $0x28] sm:$0xff]
  %v26 = vld [vmem:[%s0 + $0x30] sm:$0xff]
  %v27 = vld [vmem:[%s0 + $0x38] sm:$0xff]
  %v28 = vld [vmem:[%s0 + $0x40] sm:$0xff]
  %v29 = vld [vmem:[%s0 + $0x48] sm:$0xff]
  %v30 = vld [vmem:[%s0 + $0x50] sm:$0xff]
  %v31 = vld [vmem:[%s0 + $0x58] sm:$0xff]
  %v32 = vld [vmem:[%s0 + $0x60] sm:$0xff]
  %v33 = vld [vmem:[%s0 + $0x68] sm:$0xff]
  %v34 = vld [vmem:[%s0 + $0x70] sm:$0xff]
  %v35 = vld [vmem:[%s0 + $0x78] sm:$0xff]
  %v36 = vld [vmem:[%s0 + $0x80] sm:$0xff]
  %v37 = vld [vmem:[%s0 + $0x88] sm:$0xff]
  %v38 = vld [vmem:[%s2] sm:$0xff]
  %v39 = vld [vmem:[%s2 + $0x8] sm:$0xff]
  %41 = vset.pattern.permute.xlu0 0
  %42 = vperm.xlu0 %41, %v38
  %v43 = vpop.permute.xlu0 %42
  %46 = vset.pattern.permute.xlu0 0
  %47 = vperm.xlu0 %46, %v39
  %v48 = vpop.permute.xlu0 %47
  %vm50 = vcmask 130048
  %v52 = vsel %vm50, %v17, 0
  %v55 = vsel %vm50, %v19, 0
  %57 = vmatprep.subr.mxu0 0.0
  %58 = vmatpush1.msra.mxu0 %v35
  %59 = vmatprep.subr.mxu0 0.0
  %60 = vmatpush1.msra.mxu0 %v34
  %61 = vmatprep.subr.mxu0 0.0
  %62 = vmatpush1.msra.mxu0 %v33
  %63 = vmatprep.subr.mxu0 0.0
  %64 = vmatpush1.msra.mxu0 %v32
  %65 = vmatprep.subr.mxu0 0.0
  %66 = vmatpush1.msra.mxu0 %v31
  %67 = vmatprep.subr.mxu0 0.0
  %68 = vmatpush1.msra.mxu0 %v30
  %69 = vmatprep.subr.mxu0 0.0
  %70 = vmatpush1.msra.mxu0 %v29
  %71 = vmatprep.subr.mxu0 0.0
  %72 = vmatpush1.msra.mxu0 %v28
  %73 = vmatprep.subr.mxu0 0.0
  %74 = vmatpush1.msra.mxu0 %v27
  %75 = vmatprep.subr.mxu0 0.0
  %76 = vmatpush1.msra.mxu0 %v26
  %77 = vmatprep.subr.mxu0 0.0
  %78 = vmatpush1.msra.mxu0 %v25
  %79 = vmatprep.subr.mxu0 0.0
  %80 = vmatpush1.msra.mxu0 %v24
  %81 = vmatprep.subr.mxu0 0.0
  %82 = vmatpush1.msra.mxu0 %v23
  %83 = vmatprep.subr.mxu0 0.0
  %84 = vmatpush1.msra.mxu0 %v22
  %85 = vmatprep.subr.mxu0 0.0
  %86 = vmatpush1.msra.mxu0 %v21
  %87 = vmatprep.subr.mxu0 0.0
  %88 = vmatpush1.msra.mxu0 %v20
  %89 = vmatprep.subr.mxu0 0.0
  %90 = vmatpush2.msra.mxu0 0.0
  %91 = vmatprep.subr.mxu0 0.0
  %92 = vmatpush2.msra.mxu0 0.0
  %93 = vmatprep.subr.mxu0 0.0
  %94 = vmatpush2.msra.mxu0 0.0
  %95 = vmatprep.subr.mxu0 0.0
  %96 = vmatpush2.msra.mxu0 0.0
  %97 = vmatprep.subr.mxu0 0.0
  %98 = vmatpush2.msra.mxu0 0.0
  %99 = vmatprep.subr.mxu0 0.0
  %100 = vmatpush2.msra.mxu0 0.0
  %101 = vmatprep.subr.mxu0 0.0
  %102 = vmatpush2.msra.mxu0 0.0
  %103 = vmatprep.subr.mxu0 0.0
  %104 = vmatpush2.msra.mxu0 0.0
  %105 = vmatprep.subr.mxu0 0.0
  %106 = vmatpush2.msra.mxu0 0.0
  %107 = vmatprep.subr.mxu0 0.0
  %108 = vmatpush2.msra.mxu0 0.0
  %109 = vmatprep.subr.mxu0 0.0
  %110 = vmatpush2.msra.mxu0 0.0
  %111 = vmatprep.subr.mxu0 0.0
  %112 = vmatpush2.msra.mxu0 0.0
  %113 = vmatprep.subr.mxu0 0.0
  %114 = vmatpush2.msra.mxu0 0.0
  %115 = vmatprep.subr.mxu0 0.0
  %116 = vmatpush2.msra.mxu0 0.0
  %117 = vmatprep.subr.mxu0 0.0
  %118 = vmatpush2.msra.mxu0 %v37
  %119 = vmatprep.subr.mxu0 0.0
  %120 = vmatpush2.msra.mxu0 %v36
  %121 = vmatprep.mubr.f32.mxu0 %v52
  %122 = vmatmul.mubr.f32.gmra.mxu0 %v16
  %v123 = vpop.f32.mrf.mxu0
  %v124 = vadd.f32 %v43, %v123
  %v125 = vpop.f32.mrf.mxu0
  %126 = vmatprep.mubr.f32.mxu0 %v55
  %127 = vmatmul.mubr.f32.gmra.mxu0 %v18
  %v128 = vpop.f32.mrf.mxu0
  %v129 = vadd.f32 %v48, %v128
  %v130 = vpop.f32.mrf.mxu0
  %131 = vdwg.mxu0
  %vm132 = vcmask 408576
  %v133 = vsel %vm132, %v124, 0.0
  %134 = vadd.xlane.f32.xlu0 %v133
  %v135 = vpop.xlane.xlu0 %134
  %v136 = vsel %vm132, %v129, 0.0
  %137 = vadd.xlane.f32.xlu0 %v136
  %v138 = vpop.xlane.xlu0 %137
  %v139 = vrcp.pop 50.0
  %v140 = vmul.f32 %v135, %v139
  %v141 = vmul.f32 %v138, %v139
  %v142 = vsub.f32 %v124, %v140
  %v143 = vsub.f32 %v129, %v141
  %v144 = vmul.f32 %v142, %v142
  %v145 = vmul.f32 %v143, %v143
  %v146 = vsel %vm132, %v144, 0.0
  %147 = vadd.xlane.f32.xlu0 %v146
  %v148 = vpop.xlane.xlu0 %147
  %v149 = vsel %vm132, %v145, 0.0
  %150 = vadd.xlane.f32.xlu0 %v149
  %v151 = vpop.xlane.xlu0 %150
  %v152 = vmul.f32 %v148, %v139
  %v153 = vmul.f32 %v151, %v139
  %v154 = vadd.f32 %v152, 1e-05
  %v155 = vadd.f32 %v153, 1e-05
  %v156 = vrsqrt.pop %v154
  %v157 = vrsqrt.pop %v155
  %v158 = vmul.f32 %v142, %v156
  %v159 = vmul.f32 %v143, %v157
  %v160 = vmax.f32 %v158, 0.0
  %v161 = vmax.f32 %v159, 0.0
  %162 = vst.msk [vmem:[%s3] sm:$0xff] %vm132, %v160
  %163 = vst.msk [vmem:[%s4] sm:$0xff] %vm132, %v161
  // Predicated region
  $region14: #{forward.4} parent=0 // pred_check
    _
  $region15: #{forward.4} parent=0 // pred_check_branch
    %165 = sbr.rel (0) target = $region17
  $region16: #{forward.4} parent=0 // pred_region
    _
  $region17: #{forward.4} parent=0 // pred_fallthru
    _
  // Predicated region
  $region18: #{forward.4} parent=0 // pred_check
    _
  $region19: #{forward.4} parent=0 // pred_check_branch
    %167 = sbr.rel (0) target = $region21
  $region20: #{forward.4} parent=0 // pred_region
    _
  $region21: #{forward.4} parent=0 // pred_fallthru
    _
  // Predicated region
  $region22: #{forward.4} parent=0 // pred_check
    _
  $region23: #{forward.4} parent=0 // pred_check_branch
    %169 = sbr.rel (0) target = $region25
  $region24: #{forward.4} parent=0 // pred_region
    _
  $region25: #{forward.4} parent=0 // pred_fallthru
    _
  // Predicated region
  $region26: #{forward.4} parent=0 // pred_check
    _
  $region27: #{forward.4} parent=0 // pred_check_branch
    %171 = sbr.rel (0) target = $region29
  $region28: #{forward.4} parent=0 // pred_region
    _
  $region29: #{forward.4} parent=0 // pred_fallthru
    _

// kernel: forward.5
$region0: #{forward.5}
  #allocation0 [shape = 'u32[]', space=smem, size = 0x4, offset = 0x4, fixed_abs, tag = 'smem constant byte address 0x4 - core index']
  #allocation1 [shape = 'u32[144,128]{1,0:T(1,128)}', space=vmem, size = 0x12000, scoped, tag = 'internal scratch']
  %s0 = inlined_call_operand.vmem [shape: f32[2,64], index: 0, kind: input, shape index: {}]
  %s1 = inlined_call_operand.vmem [shape: f32[64,64], index: 1, kind: input, shape index: {}]
  %s2 = inlined_call_operand.vmem [shape: f32[1,64], index: 2, kind: input, shape index: {}]
  %s3 = inlined_call_operand.vmem [shape: f32[64,64], index: 3, kind: input, shape index: {}]
  %s4 = inlined_call_operand.vmem [shape: f32[1,64], index: 4, kind: input, shape index: {}]
  %s5 = inlined_call_operand.vmem [shape: f32[64,20], index: 5, kind: input, shape index: {}]
  %s6 = inlined_call_operand.vmem [shape: f32[1,20], index: 6, kind: input, shape index: {}]
  %s7 = inlined_call_operand.hbm [shape: f32[2,10], index: 7, kind: output, shape index: {}]
  %s8 = sld [smem:[#allocation0]]
  $region38: #{forward.5} parent=0
    _
  %s10 = ssub.s32 1, %s8
  %s11 = scalar_select 0, %s10, %s8
  $region1: #{forward.5} parent=0
    #allocation2 [shape = 'u8[1024]{0}', space=vmem, size = 0x400, scoped, tag = 'output window, operand 0, single buffered']
    #allocation3 [shape = 's32[1]{0}', space=sflag, size = 0x4, scoped, tag = 'scoped memory for forward.5']
    %12 = vsyncpa [#allocation3], 0
    // Predicated region
    $region2: #{forward.5} parent=1 // pred_check
      _
    $region3: #{forward.5} parent=1 // pred_check_branch
      %14 = sbr.rel (0) target = $region5
    $region4: #{forward.5} parent=1 // pred_region
      _
    $region5: #{forward.5} parent=1 // pred_fallthru
      _
    // Predicated region
    $region6: #{forward.5} parent=1 // pred_check
      _
    $region7: #{forward.5} parent=1 // pred_check_branch
      %16 = sbr.rel (0) target = $region9
    $region8: #{forward.5} parent=1 // pred_region
      _
    $region9: #{forward.5} parent=1 // pred_fallthru
      _
    // Predicated region
    $region10: #{forward.5} parent=1 // pred_check
      _
    $region11: #{forward.5} parent=1 // pred_check_branch
      %18 = sbr.rel (0) target = $region13
    $region12: #{forward.5} parent=1 // pred_region
      _
    $region13: #{forward.5} parent=1 // pred_fallthru
      _
    // Predicated region
    $region14: #{forward.5} parent=1 // pred_check
      _
    $region15: #{forward.5} parent=1 // pred_check_branch
      %20 = sbr.rel (0) target = $region17
    $region16: #{forward.5} parent=1 // pred_region
      _
    $region17: #{forward.5} parent=1 // pred_fallthru
      _
    // Predicated region
    $region18: #{forward.5} parent=1 // pred_check
      _
    $region19: #{forward.5} parent=1 // pred_check_branch
      %22 = sbr.rel (0) target = $region21
    $region20: #{forward.5} parent=1 // pred_region
      _
    $region21: #{forward.5} parent=1 // pred_fallthru
      _
    // Predicated region
    $region22: #{forward.5} parent=1 // pred_check
      _
    $region23: #{forward.5} parent=1 // pred_check_branch
      %24 = sbr.rel (0) target = $region25
    $region24: #{forward.5} parent=1 // pred_region
      _
    $region25: #{forward.5} parent=1 // pred_fallthru
      _
    // Predicated region
    $region26: #{forward.5} parent=1 // pred_check
      _
    $region27: #{forward.5} parent=1 // pred_check_branch
      %26 = sbr.rel (0) target = $region29
    $region28: #{forward.5} parent=1 // pred_region
      _
    $region29: #{forward.5} parent=1 // pred_fallthru
      _
    %v27 = vld [vmem:[%s0] sm:$0x3]
    %v28 = vld [vmem:[%s1] sm:$0xff]
    %v29 = vld [vmem:[%s1 + $0x8] sm:$0xff]
    %v30 = vld [vmem:[%s1 + $0x10] sm:$0xff]
    %v31 = vld [vmem:[%s1 + $0x18] sm:$0xff]
    %v32 = vld [vmem:[%s1 + $0x20] sm:$0xff]
    %v33 = vld [vmem:[%s1 + $0x28] sm:$0xff]
    %v34 = vld [vmem:[%s1 + $0x30] sm:$0xff]
    %v35 = vld [vmem:[%s1 + $0x38] sm:$0xff]
    %v36 = vld [vmem:[%s2] sm:$0x1]
    %v38 = vlaneseq
    %v39 = vshrl.u32 %v38, 7
    %v40 = vsub.s32 0, %v39
    %v41 = vrot.slane %v36, %v40
    %vm43 = vcmask 523264
    %v45 = vsel %vm43, %v27, 0
    %47 = vmatprep.subr.mxu0 0.0
    %48 = vmatpush1.msra.mxu0 0.0
    %49 = vmatprep.subr.mxu0 0.0
    %50 = vmatpush1.msra.mxu0 0.0
    %51 = vmatprep.subr.mxu0 0.0
    %52 = vmatpush1.msra.mxu0 0.0
    %53 = vmatprep.subr.mxu0 0.0
    %54 = vmatpush1.msra.mxu0 0.0
    %55 = vmatprep.subr.mxu0 0.0
    %56 = vmatpush1.msra.mxu0 0.0
    %57 = vmatprep.subr.mxu0 0.0
    %58 = vmatpush1.msra.mxu0 0.0
    %59 = vmatprep.subr.mxu0 0.0
    %60 = vmatpush1.msra.mxu0 0.0
    %61 = vmatprep.subr.mxu0 0.0
    %62 = vmatpush1.msra.mxu0 0.0
    %63 = vmatprep.subr.mxu0 0.0
    %64 = vmatpush1.msra.mxu0 %v35
    %65 = vmatprep.subr.mxu0 0.0
    %66 = vmatpush1.msra.mxu0 %v34
    %67 = vmatprep.subr.mxu0 0.0
    %68 = vmatpush1.msra.mxu0 %v33
    %69 = vmatprep.subr.mxu0 0.0
    %70 = vmatpush1.msra.mxu0 %v32
    %71 = vmatprep.subr.mxu0 0.0
    %72 = vmatpush1.msra.mxu0 %v31
    %73 = vmatprep.subr.mxu0 0.0
    %74 = vmatpush1.msra.mxu0 %v30
    %75 = vmatprep.subr.mxu0 0.0
    %76 = vmatpush1.msra.mxu0 %v29
    %77 = vmatprep.subr.mxu0 0.0
    %78 = vmatpush1.msra.mxu0 %v28
    %79 = vmatprep.subr.mxu0 0.0
    %80 = vmatpush2.msra.mxu0 0.0
    %81 = vmatprep.subr.mxu0 0.0
    %82 = vmatpush2.msra.mxu0 0.0
    %83 = vmatprep.subr.mxu0 0.0
    %84 = vmatpush2.msra.mxu0 0.0
    %85 = vmatprep.subr.mxu0 0.0
    %86 = vmatpush2.msra.mxu0 0.0
    %87 = vmatprep.subr.mxu0 0.0
    %88 = vmatpush2.msra.mxu0 0.0
    %89 = vmatprep.subr.mxu0 0.0
    %90 = vmatpush2.msra.mxu0 0.0
    %91 = vmatprep.subr.mxu0 0.0
    %92 = vmatpush2.msra.mxu0 0.0
    %93 = vmatprep.subr.mxu0 0.0
    %94 = vmatpush2.msra.mxu0 0.0
    %95 = vmatprep.subr.mxu0 0.0
    %96 = vmatpush2.msra.mxu0 0.0
    %97 = vmatprep.subr.mxu0 0.0
    %98 = vmatpush2.msra.mxu0 0.0
    %99 = vmatprep.subr.mxu0 0.0
    %100 = vmatpush2.msra.mxu0 0.0
    %101 = vmatprep.subr.mxu0 0.0
    %102 = vmatpush2.msra.mxu0 0.0
    %103 = vmatprep.subr.mxu0 0.0
    %104 = vmatpush2.msra.mxu0 0.0
    %105 = vmatprep.subr.mxu0 0.0
    %106 = vmatpush2.msra.mxu0 0.0
    %107 = vmatprep.subr.mxu0 0.0
    %108 = vmatpush2.msra.mxu0 0.0
    %109 = vmatprep.subr.mxu0 0.0
    %110 = vmatpush2.msra.mxu0 0.0
    %111 = vmatprep.mubr.f32.mxu0 0.0
    %112 = vmatmul.mubr.f32.gmra.mxu0 %v45
    %v113 = vpop.f32.mrf.mxu0
    %v114 = vadd.f32 %v41, %v113
    %v115 = vpop.f32.mrf.mxu0
    %116 = vdwg.mxu0
    %vm117 = vcmask 517120
    %v118 = vsel %vm117, %v114, 0.0
    %v119 = vrot.slane %v118, 4
    %v120 = vadd.f32 %v118, %v119
    %v121 = vrot.slane %v120, 2
    %v122 = vadd.f32 %v120, %v121
    %v123 = vrot.slane %v122, 1
    %v124 = vadd.f32 %v122, %v123
    %v125 = vrcp.pop 2.0
    %v126 = vmul.f32 %v124, %v125
    %v127 = vsub.f32 %v114, %v126
    %v128 = vmul.f32 %v127, %v127
    %v129 = vsel %vm117, %v128, 0.0
    %v130 = vrot.slane %v129, 4
    %v131 = vadd.f32 %v129, %v130
    %v132 = vrot.slane %v131, 2
    %v133 = vadd.f32 %v131, %v132
    %v134 = vrot.slane %v133, 1
    %v135 = vadd.f32 %v133, %v134
    %v136 = vmul.f32 %v135, %v125
    %v137 = vadd.f32 %v136, 1e-05
    %v138 = vrsqrt.pop %v137
    %v139 = vmul.f32 %v127, %v138
    %v140 = vmax.f32 %v139, 0.0
    %v141 = vld [vmem:[%s3] sm:$0xff]
    %v142 = vld [vmem:[%s3 + $0x8] sm:$0xff]
    %v143 = vld [vmem:[%s3 + $0x10] sm:$0xff]
    %v144 = vld [vmem:[%s3 + $0x18] sm:$0xff]
    %v145 = vld [vmem:[%s3 + $0x20] sm:$0xff]
    %v146 = vld [vmem:[%s3 + $0x28] sm:$0xff]
    %v147 = vld [vmem:[%s3 + $0x30] sm:$0xff]
    %v148 = vld [vmem:[%s3 + $0x38] sm:$0xff]
    %v149 = vld [vmem:[%s4] sm:$0x1]
    %v151 = vlaneseq
    %v152 = vshrl.u32 %v151, 7
    %v153 = vsub.s32 0, %v152
    %v154 = vrot.slane %v149, %v153
    %v157 = vsel %vm43, %v140, 0
    %159 = vmatprep.subr.mxu0 0.0
    %160 = vmatpush1.msra.mxu0 0.0
    %161 = vmatprep.subr.mxu0 0.0
    %162 = vmatpush1.msra.mxu0 0.0
    %163 = vmatprep.subr.mxu0 0.0
    %164 = vmatpush1.msra.mxu0 0.0
    %165 = vmatprep.subr.mxu0 0.0
    %166 = vmatpush1.msra.mxu0 0.0
    %167 = vmatprep.subr.mxu0 0.0
    %168 = vmatpush1.msra.mxu0 0.0
    %169 = vmatprep.subr.mxu0 0.0
    %170 = vmatpush1.msra.mxu0 0.0
    %171 = vmatprep.subr.mxu0 0.0
    %172 = vmatpush1.msra.mxu0 0.0
    %173 = vmatprep.subr.mxu0 0.0
    %174 = vmatpush1.msra.mxu0 0.0
    %175 = vmatprep.subr.mxu0 0.0
    %176 = vmatpush1.msra.mxu0 %v148
    %177 = vmatprep.subr.mxu0 0.0
    %178 = vmatpush1.msra.mxu0 %v147
    %179 = vmatprep.subr.mxu0 0.0
    %180 = vmatpush1.msra.mxu0 %v146
    %181 = vmatprep.subr.mxu0 0.0
    %182 = vmatpush1.msra.mxu0 %v145
    %183 = vmatprep.subr.mxu0 0.0
    %184 = vmatpush1.msra.mxu0 %v144
    %185 = vmatprep.subr.mxu0 0.0
    %186 = vmatpush1.msra.mxu0 %v143
    %187 = vmatprep.subr.mxu0 0.0
    %188 = vmatpush1.msra.mxu0 %v142
    %189 = vmatprep.subr.mxu0 0.0
    %190 = vmatpush1.msra.mxu0 %v141
    %191 = vmatprep.subr.mxu0 0.0
    %192 = vmatpush2.msra.mxu0 0.0
    %193 = vmatprep.subr.mxu0 0.0
    %194 = vmatpush2.msra.mxu0 0.0
    %195 = vmatprep.subr.mxu0 0.0
    %196 = vmatpush2.msra.mxu0 0.0
    %197 = vmatprep.subr.mxu0 0.0
    %198 = vmatpush2.msra.mxu0 0.0
    %199 = vmatprep.subr.mxu0 0.0
    %200 = vmatpush2.msra.mxu0 0.0
    %201 = vmatprep.subr.mxu0 0.0
    %202 = vmatpush2.msra.mxu0 0.0
    %203 = vmatprep.subr.mxu0 0.0
    %204 = vmatpush2.msra.mxu0 0.0
    %205 = vmatprep.subr.mxu0 0.0
    %206 = vmatpush2.msra.mxu0 0.0
    %207 = vmatprep.subr.mxu0 0.0
    %208 = vmatpush2.msra.mxu0 0.0
    %209 = vmatprep.subr.mxu0 0.0
    %210 = vmatpush2.msra.mxu0 0.0
    %211 = vmatprep.subr.mxu0 0.0
    %212 = vmatpush2.msra.mxu0 0.0
    %213 = vmatprep.subr.mxu0 0.0
    %214 = vmatpush2.msra.mxu0 0.0
    %215 = vmatprep.subr.mxu0 0.0
    %216 = vmatpush2.msra.mxu0 0.0
    %217 = vmatprep.subr.mxu0 0.0
    %218 = vmatpush2.msra.mxu0 0.0
    %219 = vmatprep.subr.mxu0 0.0
    %220 = vmatpush2.msra.mxu0 0.0
    %221 = vmatprep.subr.mxu0 0.0
    %222 = vmatpush2.msra.mxu0 0.0
    %223 = vmatprep.mubr.f32.mxu0 0.0
    %224 = vmatmul.mubr.f32.gmra.mxu0 %v157
    %v225 = vpop.f32.mrf.mxu0
    %v226 = vadd.f32 %v154, %v225
    %v227 = vpop.f32.mrf.mxu0
    %228 = vdwg.mxu0
    %v229 = vsel %vm117, %v226, 0.0
    %v230 = vrot.slane %v229, 4
    %v231 = vadd.f32 %v229, %v230
    %v232 = vrot.slane %v231, 2
    %v233 = vadd.f32 %v231, %v232
    %v234 = vrot.slane %v233, 1
    %v235 = vadd.f32 %v233, %v234
    %v236 = vmul.f32 %v235, %v125
    %v237 = vsub.f32 %v226, %v236
    %v238 = vmul.f32 %v237, %v237
    %v239 = vsel %vm117, %v238, 0.0
    %v240 = vrot.slane %v239, 4
    %v241 = vadd.f32 %v239, %v240
    %v242 = vrot.slane %v241, 2
    %v243 = vadd.f32 %v241, %v242
    %v244 = vrot.slane %v243, 1
    %v245 = vadd.f32 %v243, %v244
    %v246 = vmul.f32 %v245, %v125
    %v247 = vadd.f32 %v246, 1e-05
    %v248 = vrsqrt.pop %v247
    %v249 = vmul.f32 %v237, %v248
    %v250 = vmax.f32 %v249, 0.0
    %v251 = vld [vmem:[%s5] sm:$0xff]
    %v252 = vld [vmem:[%s5 + $0x8] sm:$0xff]
    %v253 = vld [vmem:[%s5 + $0x10] sm:$0xff]
    %v254 = vld [vmem:[%s5 + $0x18] sm:$0xff]
    %v255 = vld [vmem:[%s5 + $0x20] sm:$0xff]
    %v256 = vld [vmem:[%s5 + $0x28] sm:$0xff]
    %v257 = vld [vmem:[%s5 + $0x30] sm:$0xff]
    %v258 = vld [vmem:[%s5 + $0x38] sm:$0xff]
    %v259 = vld [vmem:[%s6] sm:$0x1]
    %v261 = vlaneseq
    %v262 = vshrl.u32 %v261, 7
    %v263 = vsub.s32 0, %v262
    %v264 = vrot.slane %v259, %v263
    %v267 = vsel %vm43, %v250, 0
    %269 = vmatprep.subr.mxu0 0.0
    %270 = vmatpush1.msra.mxu0 0.0
    %271 = vmatprep.subr.mxu0 0.0
    %272 = vmatpush1.msra.mxu0 0.0
    %273 = vmatprep.subr.mxu0 0.0
    %274 = vmatpush1.msra.mxu0 0.0
    %275 = vmatprep.subr.mxu0 0.0
    %276 = vmatpush1.msra.mxu0 0.0
    %277 = vmatprep.subr.mxu0 0.0
    %278 = vmatpush1.msra.mxu0 0.0
    %279 = vmatprep.subr.mxu0 0.0
    %280 = vmatpush1.msra.mxu0 0.0
    %281 = vmatprep.subr.mxu0 0.0
    %282 = vmatpush1.msra.mxu0 0.0
    %283 = vmatprep.subr.mxu0 0.0
    %284 = vmatpush1.msra.mxu0 0.0
    %285 = vmatprep.subr.mxu0 0.0
    %286 = vmatpush1.msra.mxu0 %v258
    %287 = vmatprep.subr.mxu0 0.0
    %288 = vmatpush1.msra.mxu0 %v257
    %289 = vmatprep.subr.mxu0 0.0
    %290 = vmatpush1.msra.mxu0 %v256
    %291 = vmatprep.subr.mxu0 0.0
    %292 = vmatpush1.msra.mxu0 %v255
    %293 = vmatprep.subr.mxu0 0.0
    %294 = vmatpush1.msra.mxu0 %v254
    %295 = vmatprep.subr.mxu0 0.0
    %296 = vmatpush1.msra.mxu0 %v253
    %297 = vmatprep.subr.mxu0 0.0
    %298 = vmatpush1.msra.mxu0 %v252
    %299 = vmatprep.subr.mxu0 0.0
    %300 = vmatpush1.msra.mxu0 %v251
    %301 = vmatprep.subr.mxu0 0.0
    %302 = vmatpush2.msra.mxu0 0.0
    %303 = vmatprep.subr.mxu0 0.0
    %304 = vmatpush2.msra.mxu0 0.0
    %305 = vmatprep.subr.mxu0 0.0
    %306 = vmatpush2.msra.mxu0 0.0
    %307 = vmatprep.subr.mxu0 0.0
    %308 = vmatpush2.msra.mxu0 0.0
    %309 = vmatprep.subr.mxu0 0.0
    %310 = vmatpush2.msra.mxu0 0.0
    %311 = vmatprep.subr.mxu0 0.0
    %312 = vmatpush2.msra.mxu0 0.0
    %313 = vmatprep.subr.mxu0 0.0
    %314 = vmatpush2.msra.mxu0 0.0
    %315 = vmatprep.subr.mxu0 0.0
    %316 = vmatpush2.msra.mxu0 0.0
    %317 = vmatprep.subr.mxu0 0.0
    %318 = vmatpush2.msra.mxu0 0.0
    %319 = vmatprep.subr.mxu0 0.0
    %320 = vmatpush2.msra.mxu0 0.0
    %321 = vmatprep.subr.mxu0 0.0
    %322 = vmatpush2.msra.mxu0 0.0
    %323 = vmatprep.subr.mxu0 0.0
    %324 = vmatpush2.msra.mxu0 0.0
    %325 = vmatprep.subr.mxu0 0.0
    %326 = vmatpush2.msra.mxu0 0.0
    %327 = vmatprep.subr.mxu0 0.0
    %328 = vmatpush2.msra.mxu0 0.0
    %329 = vmatprep.subr.mxu0 0.0
    %330 = vmatpush2.msra.mxu0 0.0
    %331 = vmatprep.subr.mxu0 0.0
    %332 = vmatpush2.msra.mxu0 0.0
    %333 = vmatprep.mubr.f32.mxu0 0.0
    %334 = vmatmul.mubr.f32.gmra.mxu0 %v267
    %v335 = vpop.f32.mrf.mxu0
    %v336 = vadd.f32 %v264, %v335
    %v337 = vpop.f32.mrf.mxu0
    %338 = vdwg.mxu0
    %v339 = vmul.f32 %v336, %v336
    %341 = vrot.lane.b32.xlu0 %v339, 118
    %v342 = vpop.permute.xlu0 %341
    %v344 = vadd.f32 %v339, %v342
    %vm345 = vcmask 74752
    %v346 = vsel %vm345, %v344, -inf
    %347 = vmax.xlane.f32.xlu0 %v346
    %v348 = vpop.xlane.xlu0 %347
    %v349 = vsub.f32 %v344, %v348
    %v350 = vmul.f32 %v349, 1.442695
    %v351 = vpow.pop %v350
    %v352 = vsel %vm345, %v351, 0.0
    %353 = vadd.xlane.f32.xlu0 %v352
    %v354 = vpop.xlane.xlu0 %353
    %v355 = vlog2.pop %v354
    %v356 = vmul.f32 %v355, 0.6931472
    %v357 = vsub.f32 %v349, %v356
    %358 = vst.msk [vmem:[#allocation2] sm:$0x3] %vm345, %v357
    // Predicated region
    $region30: #{forward.5} parent=1 // pred_check
      _
    $region31: #{forward.5} parent=1 // pred_check_branch
      %360 = sbr.rel (0) target = $region33
    $region32: #{forward.5} parent=1 // pred_region
      %s362 = ssub.s32 32, 32
      %363 = vsyncadd [#allocation3], %s362
      %s365 = sshll.u32 [#allocation2], 4
      %s366 = int_to_ptr.vmem [resolvable:$true] %s365
      %368 = dma.vmem_to_hbm [thread:$0]  %s366, 32, %s7, [#allocation3]
    $region33: #{forward.5} parent=1 // pred_fallthru
      _
    // Predicated region
    $region34: #{forward.5} parent=1 // pred_check
      _
    $region35: #{forward.5} parent=1 // pred_check_branch
      %370 = sbr.rel (0) target = $region37
    $region36: #{forward.5} parent=1 // pred_region
      %371 = dma.done [#allocation3], 32
    $region37: #{forward.5} parent=1 // pred_fallthru
      _
    %372 = vsyncpa [#allocation3], 1

</llo_original>
